<compile_context>
chip_gen: v5e
topology: v5e:2x2
jax: 0.10.0
libtpu: 0.0.40
codegen_flags: <defaults>
</compile_context>

<pallas_src>
import jax
import jax.numpy as jnp
from jax import lax
from jax.experimental import pallas as pl
from jax.experimental.pallas import tpu as pltpu


# Contract last dim of x (tm, tk) with last dim of w (tn, tk)  ->  (tm, tn).
_NT_DIMS = (((1,), (1,)), ((), ()))


def _pf_linear_kernel(x_ref, w_ref, o_ref, acc_ref):
    k = pl.program_id(2)

    @pl.when(k == 0)
    def _init():
        acc_ref[...] = jnp.zeros_like(acc_ref)

    acc_ref[...] += lax.dot_general(
        x_ref[...], w_ref[...], _NT_DIMS, preferred_element_type=jnp.float32)

    @pl.when(k == pl.num_programs(2) - 1)
    def _store():
        o_ref[...] = acc_ref[...].astype(o_ref.dtype)


def _pf_linear_bias_kernel(x_ref, w_ref, b_ref, o_ref, acc_ref):
    k = pl.program_id(2)

    @pl.when(k == 0)
    def _init():
        acc_ref[...] = jnp.zeros_like(acc_ref)

    acc_ref[...] += lax.dot_general(
        x_ref[...], w_ref[...], _NT_DIMS, preferred_element_type=jnp.float32)

    @pl.when(k == pl.num_programs(2) - 1)
    def _store():
        o_ref[...] = (acc_ref[...] + b_ref[...].astype(jnp.float32)).astype(o_ref.dtype)


def partially_frozen_linear(x, w1, w2, b1=None, b2=None, *,
                            tm=256, tn=256, tk=512):
    """x: (..., K); w1: (pivot, K) frozen; w2: (N - pivot, K) trainable.

    Tile defaults target v6e/v7x (MXU dim 256); use tm=tn=128 on v5e.
    """
    K = x.shape[-1]
    assert w1.shape[-1] == K and w2.shape[-1] == K
    N = w1.shape[0] + w2.shape[0]

    lead = x.shape[:-1]
    x2d = x.reshape(-1, K)
    M = x2d.shape[0]

    # Fuse the two halves into a single (N, K) operand (one boundary-side copy)
    # so the kernel is one MXU matmul with a single lane-dense output store.
    w = jnp.concatenate([w1, w2], axis=0)

    bias = None
    if b1 is not None or b2 is not None:
        assert b1 is not None and b2 is not None, "provide both b1 and b2 or neither"
        bias = jnp.concatenate([b1, b2], axis=0).reshape(1, N).astype(jnp.float32)

    # Tile selection.  Blocks smaller than the array must respect the (8, 128)
    # divisibility rule; a block equal to the full dim is always legal.
    tm = M if M <= tm else tm
    tn = N if N <= tn else tn
    # The K (reduction) axis must tile exactly — a ragged K block would feed
    # garbage into the accumulation — so fall back to full K if it doesn't.
    tk = tk if (K > tk and K % tk == 0) else K

    grid = (pl.cdiv(M, tm), pl.cdiv(N, tn), pl.cdiv(K, tk))

    in_specs = [
        pl.BlockSpec((tm, tk), lambda i, j, k: (i, k)),   # activations
        pl.BlockSpec((tn, tk), lambda i, j, k: (j, k)),   # fused weight (N, K)
    ]
    args = [x2d, w]
    kernel = _pf_linear_kernel
    if bias is not None:
        in_specs.append(pl.BlockSpec((1, tn), lambda i, j, k: (0, j)))
        args.append(bias)
        kernel = _pf_linear_bias_kernel

    out = pl.pallas_call(
        kernel,
        out_shape=jax.ShapeDtypeStruct((M, N), x.dtype),
        grid_spec=pltpu.PrefetchScalarGridSpec(
            num_scalar_prefetch=0,
            grid=grid,
            in_specs=in_specs,
            out_specs=pl.BlockSpec((tm, tn), lambda i, j, k: (i, j)),
            scratch_shapes=[pltpu.VMEM((tm, tn), jnp.float32)],
        ),
        compiler_params=pltpu.CompilerParams(
            # M/N shard across TensorCores (megacore); K is the reduction axis.
            dimension_semantics=("parallel", "parallel", "arbitrary"),
            # Explicit, modest limit: tiles above use ~3 MiB double-buffered,
            # leaving plenty of headroom even on v7x's 64 MiB VMEM.
            vmem_limit_bytes=32 * 1024 * 1024,
        ),
    )(*args)

    return out.reshape(*lead, N)


def reference(x, w1, w2, b1=None, b2=None):
    w = jnp.concatenate([w1, w2], axis=0)
    y = jnp.einsum("...k,nk->...n", x, w)
    if b1 is not None:
        y = y + jnp.concatenate([b1, b2], axis=0)
    return y


if __name__ == "__main__":
    key = jax.random.PRNGKey(0)
    k1, k2, k3, k4 = jax.random.split(key, 4)

    # --- Case 1: small shapes consistent with the module (single-block path).
    batch, seq, in_features, out_features, pivot = 2, 8, 32, 64, 24
    x = jax.random.normal(k1, (batch, seq, in_features), dtype=jnp.float32)
    weight = jax.random.normal(k2, (out_features, in_features), dtype=jnp.float32) * 0.05
    w1, w2 = weight[:pivot], weight[pivot:]

    out = jax.block_until_ready(partially_frozen_linear(x, w1, w2))
    ref = reference(x, w1, w2)
    assert out.shape == (batch, seq, out_features), out.shape
    assert jnp.allclose(out, ref, atol=1e-4, rtol=1e-4), float(jnp.max(jnp.abs(out - ref)))

    # --- Case 2: exercise the tiled path (ragged M blocks, N tiles, K accumulation).
    B2, S2, K2, N2, piv2 = 2, 300, 512, 384, 100
    x2 = jax.random.normal(k3, (B2, S2, K2), dtype=jnp.float32)
    weight2 = jax.random.normal(k4, (N2, K2), dtype=jnp.float32) * 0.02
    w1b, w2b = weight2[:piv2], weight2[piv2:]

    out2 = jax.block_until_ready(
        partially_frozen_linear(x2, w1b, w2b, tm=128, tn=128, tk=256))
    ref2 = reference(x2, w1b, w2b)
    assert out2.shape == (B2, S2, N2), out2.shape
    assert jnp.allclose(out2, ref2, atol=2e-3, rtol=2e-3), float(jnp.max(jnp.abs(out2 - ref2)))

    print("KERNEL_OK")
</pallas_src>

<mosaic_0001>
module attributes {stable_mosaic.version = 11 : i64} {
  func.func @_pf_linear_kernel(%arg0: i32, %arg1: i32, %arg2: i32, %arg3: memref<16x32xf32, #tpu.memory_space<vmem>>, %arg4: memref<64x32xf32, #tpu.memory_space<vmem>>, %arg5: memref<16x64xf32, #tpu.memory_space<vmem>>, %arg6: memref<16x64xf32, #tpu.memory_space<vmem>>) attributes {dimension_semantics = [#tpu.dimension_semantics<parallel>, #tpu.dimension_semantics<parallel>, #tpu.dimension_semantics<arbitrary>], iteration_bounds = array<i64: 1, 1, 1>, scalar_prefetch = 0 : i64, scratch_operands = 1 : i64, tpu.core_type = #tpu.core_type<tc>, window_params = [{transform_indices = @transform_0, window_bounds = array<i64: 16, 32>}, {transform_indices = @transform_1, window_bounds = array<i64: 64, 32>}, {transform_indices = @transform_2, window_bounds = array<i64: 16, 64>}]} {
    %c0_i32 = arith.constant 0 : i32
    %0 = arith.cmpi eq, %arg2, %c0_i32 : i32
    %1 = arith.extui %0 : i1 to i32
    %c0_i32_0 = arith.constant 0 : i32
    %2 = arith.cmpi ne, %1, %c0_i32_0 : i32
    scf.if %2 {
      %cst_10 = arith.constant 0.000000e+00 : f32
      %12 = vector.broadcast %cst_10 : f32 to vector<16x64xf32>
      %c0_11 = arith.constant 0 : index
      %c0_12 = arith.constant 0 : index
      %13 = vector.load %arg6[%c0_11, %c0_12] : memref<16x64xf32, #tpu.memory_space<vmem>>, vector<16x64xf32>
      tpu.vector_store %arg6[%c0_11, %c0_12], %12 {strides = array<i32>} : memref<16x64xf32, #tpu.memory_space<vmem>>, vector<16x64xf32>,
    } else {
    }
    %c0 = arith.constant 0 : index
    %c0_1 = arith.constant 0 : index
    %3 = vector.load %arg6[%c0, %c0_1] : memref<16x64xf32, #tpu.memory_space<vmem>>, vector<16x64xf32>
    %c0_2 = arith.constant 0 : index
    %c0_3 = arith.constant 0 : index
    %4 = vector.load %arg3[%c0_2, %c0_3] : memref<16x32xf32, #tpu.memory_space<vmem>>, vector<16x32xf32>
    %c0_4 = arith.constant 0 : index
    %c0_5 = arith.constant 0 : index
    %5 = vector.load %arg4[%c0_4, %c0_5] : memref<64x32xf32, #tpu.memory_space<vmem>>, vector<64x32xf32>
    %cst = arith.constant dense<0.000000e+00> : vector<16x64xf32>
    %6 = tpu.matmul %4, %5, %cst {dimension_numbers = #tpu.dot_dimension_numbers<[1], [1], [0], [0], [0, 0, 1, 0], [], []>} : vector<16x32xf32>, vector<64x32xf32>, vector<16x64xf32> -> vector<16x64xf32>
    %7 = arith.addf %3, %6 : vector<16x64xf32>
    %c0_6 = arith.constant 0 : index
    %c0_7 = arith.constant 0 : index
    %8 = vector.load %arg6[%c0_6, %c0_7] : memref<16x64xf32, #tpu.memory_space<vmem>>, vector<16x64xf32>
    tpu.vector_store %arg6[%c0_6, %c0_7], %7 {strides = array<i32>} : memref<16x64xf32, #tpu.memory_space<vmem>>, vector<16x64xf32>,
    %c0_i32_8 = arith.constant 0 : i32
    %9 = arith.cmpi eq, %arg2, %c0_i32_8 : i32
    %10 = arith.extui %9 : i1 to i32
    %c0_i32_9 = arith.constant 0 : i32
    %11 = arith.cmpi ne, %10, %c0_i32_9 : i32
    scf.if %11 {
      %c0_10 = arith.constant 0 : index
      %c0_11 = arith.constant 0 : index
      %12 = vector.load %arg6[%c0_10, %c0_11] : memref<16x64xf32, #tpu.memory_space<vmem>>, vector<16x64xf32>
      %c0_12 = arith.constant 0 : index
      %c0_13 = arith.constant 0 : index
      %13 = vector.load %arg5[%c0_12, %c0_13] : memref<16x64xf32, #tpu.memory_space<vmem>>, vector<16x64xf32>
      tpu.vector_store %arg5[%c0_12, %c0_13], %12 {strides = array<i32>} : memref<16x64xf32, #tpu.memory_space<vmem>>, vector<16x64xf32>,
    } else {
    }
    return
  }
  func.func @transform_0(%arg0: i32, %arg1: i32, %arg2: i32) -> (i32, i32) {
    %c0_i32 = arith.constant 0 : i32
    return %arg0, %arg2 : i32, i32
  }
  func.func @transform_1(%arg0: i32, %arg1: i32, %arg2: i32) -> (i32, i32) {
    %c0_i32 = arith.constant 0 : i32
    return %arg1, %arg2 : i32, i32
  }
  func.func @transform_2(%arg0: i32, %arg1: i32, %arg2: i32) -> (i32, i32) {
    %c0_i32 = arith.constant 0 : i32
    return %arg0, %arg1 : i32, i32
  }
}

</mosaic_0001>

<llo_original>
// kernel: tpu_custom_call.1
$region0: #{tpu_custom_call.1}
  #allocation0 [shape = 'u32[]', space=smem, size = 0x4, offset = 0x4, fixed_abs, tag = 'smem constant byte address 0x4 - core index']
  #allocation1 [shape = 'u32[72,128]{1,0:T(1,128)}', space=vmem, size = 0x9000, scoped, tag = 'internal scratch']
  #allocation2 [shape = 'f32[16,64]{1,0:T(8,128)}', space=vmem, size = 0x2000, scoped, tag = 'scratch operand']
  %s0 = inlined_call_operand.vmem [shape: f32[16,32], index: 0, kind: input, shape index: {}]
  %s1 = inlined_call_operand.vmem [shape: f32[64,32], index: 1, kind: input, shape index: {}]
  %s2 = inlined_call_operand.hbm [shape: f32[16,64], index: 2, kind: output, shape index: {}]
  %s3 = sld [smem:[#allocation0]]
  $region26: #{tpu_custom_call.1} parent=0
    _
  %s5 = ssub.s32 1, %s3
  %s6 = scalar_select 0, %s5, %s3
  $region1: #{tpu_custom_call.1} parent=0
    #allocation3 [shape = 'u8[8192]{0}', space=vmem, size = 0x2000, scoped, tag = 'output window, operand 0, single buffered']
    #allocation4 [shape = 's32[1]{0}', space=sflag, size = 0x4, scoped, tag = 'scoped memory for tpu_custom_call.1']
    %7 = vsyncpa [#allocation4], 0
    // Predicated region
    $region2: #{tpu_custom_call.1} parent=1 // pred_check
      _
    $region3: #{tpu_custom_call.1} parent=1 // pred_check_branch
      %9 = sbr.rel (0) target = $region5
    $region4: #{tpu_custom_call.1} parent=1 // pred_region
      _
    $region5: #{tpu_custom_call.1} parent=1 // pred_fallthru
      _
    // Predicated region
    $region6: #{tpu_custom_call.1} parent=1 // pred_check
      _
    $region7: #{tpu_custom_call.1} parent=1 // pred_check_branch
      %11 = sbr.rel (0) target = $region9
    $region8: #{tpu_custom_call.1} parent=1 // pred_region
      _
    $region9: #{tpu_custom_call.1} parent=1 // pred_fallthru
      _
    %p12 = scmp.eq.s32.totalorder 0, 0
    // Predicated region
    $region10: #{tpu_custom_call.1} parent=1 // pred_check
      %p13 = pneg %p12
    $region11: #{tpu_custom_call.1} parent=1 // pred_check_branch
      %15 = sbr.rel (%p13) target = $region13
    $region12: #{tpu_custom_call.1} parent=1 // pred_region
      %vm16 = vcmask 523264
      %17 = vst.msk [vmem:[#allocation2] sm:$0xff] %vm16, 0.0
      %18 = vst.msk [vmem:[#allocation2 + $0x8] sm:$0xff] %vm16, 0.0
    $region13: #{tpu_custom_call.1} parent=1 // pred_fallthru
      _
    %v19 = vld [vmem:[#allocation2] sm:$0xff]
    %v20 = vld [vmem:[#allocation2 + $0x8] sm:$0xff]
    %v21 = vld [vmem:[%s0] sm:$0xff]
    %v22 = vld [vmem:[%s0 + $0x8] sm:$0xff]
    %v23 = vld [vmem:[%s1] sm:$0xff]
    %v24 = vld [vmem:[%s1 + $0x8] sm:$0xff]
    %v25 = vld [vmem:[%s1 + $0x10] sm:$0xff]
    %v26 = vld [vmem:[%s1 + $0x18] sm:$0xff]
    %v27 = vld [vmem:[%s1 + $0x20] sm:$0xff]
    %v28 = vld [vmem:[%s1 + $0x28] sm:$0xff]
    %v29 = vld [vmem:[%s1 + $0x30] sm:$0xff]
    %v30 = vld [vmem:[%s1 + $0x38] sm:$0xff]
    %vm31 = vcmask 261120
    %v33 = vsel %vm31, %v21, 0
    %v36 = vsel %vm31, %v22, 0
    %v39 = vsel %vm31, %v23, 0
    %v42 = vsel %vm31, %v24, 0
    %v45 = vsel %vm31, %v25, 0
    %v48 = vsel %vm31, %v26, 0
    %v51 = vsel %vm31, %v27, 0
    %v54 = vsel %vm31, %v28, 0
    %v57 = vsel %vm31, %v29, 0
    %v60 = vsel %vm31, %v30, 0
    %62 = vmatpush.xpose.msra.mxu0 0.0
    %63 = vmatpush.xpose.msra.mxu0 0.0
    %64 = vmatpush.xpose.msra.mxu0 0.0
    %65 = vmatpush.xpose.msra.mxu0 0.0
    %66 = vmatpush.xpose.msra.mxu0 0.0
    %67 = vmatpush.xpose.msra.mxu0 0.0
    %68 = vmatpush.xpose.msra.mxu0 0.0
    %69 = vmatpush.xpose.msra.mxu0 0.0
    %70 = vmatpush.xpose.msra.mxu0 %v60
    %71 = vmatpush.xpose.msra.mxu0 %v57
    %72 = vmatpush.xpose.msra.mxu0 %v54
    %73 = vmatpush.xpose.msra.mxu0 %v51
    %74 = vmatpush.xpose.msra.mxu0 %v48
    %75 = vmatpush.xpose.msra.mxu0 %v45
    %76 = vmatpush.xpose.msra.mxu0 %v42
    %77 = vmatpush.xpose.msra.mxu0 %v39
    %78 = vmatmul.f32.gmra.mxu0 %v33
    %v79 = vpop.f32.mrf.mxu0
    %v80 = vadd.f32 0.0, %v79
    %81 = vmatmul.f32.gmra.mxu0 %v36
    %v82 = vpop.f32.mrf.mxu0
    %v83 = vadd.f32 0.0, %v82
    %84 = vdwg.mxu0
    %v85 = vadd.f32 %v19, %v80
    %v86 = vadd.f32 %v20, %v83
    %vm87 = vcmask 523264
    %88 = vst.msk [vmem:[#allocation2] sm:$0xff] %vm87, %v85
    %89 = vst.msk [vmem:[#allocation2 + $0x8] sm:$0xff] %vm87, %v86
    // Predicated region
    $region14: #{tpu_custom_call.1} parent=1 // pred_check
      %p90 = pneg %p12
    $region15: #{tpu_custom_call.1} parent=1 // pred_check_branch
      %92 = sbr.rel (%p90) target = $region17
    $region16: #{tpu_custom_call.1} parent=1 // pred_region
      %v93 = vld [vmem:[#allocation2] sm:$0xff]
      %v94 = vld [vmem:[#allocation2 + $0x8] sm:$0xff]
      %95 = vst.msk [vmem:[#allocation3] sm:$0xff] %vm87, %v93
      %96 = vst.msk [vmem:[#allocation3 + $0x8] sm:$0xff] %vm87, %v94
    $region17: #{tpu_custom_call.1} parent=1 // pred_fallthru
      _
    // Predicated region
    $region18: #{tpu_custom_call.1} parent=1 // pred_check
      _
    $region19: #{tpu_custom_call.1} parent=1 // pred_check_branch
      %98 = sbr.rel (0) target = $region21
    $region20: #{tpu_custom_call.1} parent=1 // pred_region
      %100 = vsyncadd [#allocation4], 0
      %s101 = sshll.u32 [#allocation3], 4
      %s102 = int_to_ptr.vmem [resolvable:$true] %s101
      %s103 = sshll.u32 %s2, 4
      %s104 = int_to_ptr.hbm [resolvable:$true] %s103
      %109 = dma.vmem_to_hbm [thread:$0]  %s102, 256, %s104, [#allocation4], 128, 128, 8
    $region21: #{tpu_custom_call.1} parent=1 // pred_fallthru
      _
    // Predicated region
    $region22: #{tpu_custom_call.1} parent=1 // pred_check
      _
    $region23: #{tpu_custom_call.1} parent=1 // pred_check_branch
      %111 = sbr.rel (0) target = $region25
    $region24: #{tpu_custom_call.1} parent=1 // pred_region
      %113 = dma.done [#allocation4], 256
    $region25: #{tpu_custom_call.1} parent=1 // pred_fallthru
      _
    %114 = vsyncpa [#allocation4], 1

</llo_original>
